<compile_context>
chip_gen: v7x
topology: tpu7x:2x2x1
jax: 0.10.0
libtpu: 0.0.40
codegen_flags: <defaults>
</compile_context>

<pallas_src>
import numpy as np
import jax
import jax.numpy as jnp
from jax.experimental import pallas as pl
from jax.experimental.pallas import tpu as pltpu

# ----------------------------- configuration ---------------------------------
N, CIN, H, W = 2, 4, 16, 16          # input  (N, Cin, H, W)
COUT = 8                             # out_channels of the stem conv
OH, OW = H // 2, W // 2              # conv: k=3, stride=2, pad=1 -> 8x8
K = 9 * CIN                          # im2col contraction dim = 36
M = N * OH * OW                      # batch x spatial positions = 128 (lanes)
BN_EPS = 1e-5


# ----------------------------- Pallas kernel ---------------------------------
def _stem_kernel(wT_ref, gb_ref, pT_ref, o_ref):
    """conv (im2col matmul, bf16 in / f32 acc) + BatchNorm(batch stats) + ReLU."""
    f32 = jnp.float32
    # (COUT, K)bf16 @ (K, M)bf16 -> (COUT, M)f32. Single-pass MXU, f32 accumulate.
    y = jnp.dot(wT_ref[...], pT_ref[...], preferred_element_type=f32)

    inv_m = f32(1.0 / y.shape[1])
    # One-pass batch statistics: the two cross-lane reductions are independent,
    # so they can issue back-to-back before the rsqrt.
    s1 = jnp.sum(y, axis=1, keepdims=True)                     # (COUT, 1)
    s2 = jnp.sum(y * y, axis=1, keepdims=True)                 # (COUT, 1)
    mean = s1 * inv_m
    var = jnp.maximum(s2 * inv_m - mean * mean, 0.0)           # clamp cancellation
    inv_std = jax.lax.rsqrt(var + BN_EPS)                      # EUP rsqrt

    gamma = gb_ref[:, 0:1]                                     # (COUT, 1)
    beta = gb_ref[:, 1:2]                                      # (COUT, 1)
    scale = inv_std * gamma
    shift = beta - mean * scale
    o_ref[...] = jnp.maximum(y * scale + shift, 0.0)           # fused BN + ReLU


# ----------------------------- wrapper ----------------------------------------
def panstem1_forward(x_nchw, params):
    n = x_nchw.shape[0]
    m = n * OH * OW

    # Build the im2col patch matrix directly in channel-major (K, M) order so
    # no trailing transpose of the patch matrix is needed.
    xt = jnp.transpose(x_nchw, (1, 0, 2, 3)).astype(jnp.float32)   # (Cin, N, H, W)
    xp = jnp.pad(xt, ((0, 0), (0, 0), (1, 1), (1, 1)))             # pad=1 spatial
    # tap (dh, dw): output (oh, ow) reads xp[..., 2*oh+dh, 2*ow+dw]
    taps = [xp[:, :, dh:dh + 2 * OH:2, dw:dw + 2 * OW:2]
            for dh in range(3) for dw in range(3)]                 # 9 x (Cin,N,OH,OW)
    pT = jnp.stack(taps, axis=0).reshape(K, m).astype(jnp.bfloat16)  # (K, M) bf16

    bytes_accessed = COUT * K * 2 + K * m * 2 + COUT * 2 * 4 + COUT * m * 4
    y = pl.pallas_call(
        _stem_kernel,
        # No grid: single invocation, whole arrays resident in VMEM (~15 KB).
        in_specs=[
            pl.BlockSpec(memory_space=pltpu.MemorySpace.VMEM),   # wT (COUT, K) bf16
            pl.BlockSpec(memory_space=pltpu.MemorySpace.VMEM),   # gb (COUT, 2) f32
            pl.BlockSpec(memory_space=pltpu.MemorySpace.VMEM),   # pT (K, M)    bf16
        ],
        out_specs=pl.BlockSpec(memory_space=pltpu.MemorySpace.VMEM),
        out_shape=jax.ShapeDtypeStruct((COUT, m), jnp.float32),
        cost_estimate=pl.CostEstimate(
            flops=2 * COUT * K * m,
            transcendentals=COUT,
            bytes_accessed=bytes_accessed),
    )(params['wT'], params['gb'], pT)

    # channel-major (COUT, N*OH*OW) -> NCHW
    return jnp.transpose(y.reshape(COUT, n, OH, OW), (1, 0, 2, 3))


# ----------------------------- parameters ------------------------------------
def init_params(key):
    w = jax.random.normal(key, (COUT, CIN, 3, 3), jnp.float32) / np.sqrt(9 * CIN)
    # wT[o, (dh*3+dw)*Cin + c] = w[o, c, dh, dw]; stored bf16 for single-pass MXU.
    wT = jnp.transpose(w, (0, 2, 3, 1)).reshape(COUT, K).astype(jnp.bfloat16)
    gamma = jnp.ones((COUT,), jnp.float32)     # fresh BatchNorm2d: weight = 1
    beta = jnp.zeros((COUT,), jnp.float32)     # fresh BatchNorm2d: bias   = 0
    gb = jnp.stack([gamma, beta], axis=1)      # (COUT, 2) f32, single tiny input
    return dict(w_oihw=w, wT=wT, gb=gb, gamma=gamma, beta=beta)


# ----------------------------- pure-JAX reference ----------------------------
def panstem1_reference(x_nchw, p):
    x = jnp.transpose(x_nchw, (0, 2, 3, 1)).astype(jnp.float32)
    w = jnp.transpose(p['w_oihw'], (2, 3, 1, 0))                     # HWIO
    y = jax.lax.conv_general_dilated(
        x, w, window_strides=(2, 2), padding=[(1, 1), (1, 1)],
        dimension_numbers=('NHWC', 'HWIO', 'NHWC'),
        precision=jax.lax.Precision.HIGHEST)
    mean = jnp.mean(y, axis=(0, 1, 2))
    var = jnp.mean((y - mean) ** 2, axis=(0, 1, 2))
    y = (y - mean) / jnp.sqrt(var + BN_EPS) * p['gamma'] + p['beta']
    y = jnp.maximum(y, 0.0)
    return jnp.transpose(y, (0, 3, 1, 2))


# ----------------------------- main -------------------------------------------
if __name__ == "__main__":
    key = jax.random.PRNGKey(0)
    kx, kp = jax.random.split(key)
    x = jax.random.normal(kx, (N, CIN, H, W), dtype=jnp.float32)
    params = init_params(kp)

    out = jax.block_until_ready(jax.jit(panstem1_forward)(x, params))
    ref = jax.block_until_ready(panstem1_reference(x, params))

    assert out.shape == (N, COUT, OH, OW)
    # bf16 matmul operands (f32 accumulate) vs. f32 HIGHEST reference: allow
    # ~2e-2 absolute slack on the O(1) batch-normalized outputs.
    np.testing.assert_allclose(np.asarray(out), np.asarray(ref),
                               rtol=2e-2, atol=2e-2)
    print("KERNEL_OK")
</pallas_src>

<mosaic_0001>
module attributes {stable_mosaic.version = 11 : i64} {
  func.func @_stem_kernel(%arg0: memref<8x36xbf16, #tpu.memory_space<vmem>>, %arg1: memref<8x2xf32, #tpu.memory_space<vmem>>, %arg2: memref<36x128xbf16, #tpu.memory_space<vmem>>, %arg3: memref<8x128xf32, #tpu.memory_space<vmem>>) attributes {dimension_semantics = [], scalar_prefetch = 0 : i64, scratch_operands = 0 : i64, tpu.core_type = #tpu.core_type<tc>} {
    %c0 = arith.constant 0 : index
    %c0_0 = arith.constant 0 : index
    %0 = vector.load %arg0[%c0, %c0_0] : memref<8x36xbf16, #tpu.memory_space<vmem>>, vector<8x36xbf16>
    %c0_1 = arith.constant 0 : index
    %c0_2 = arith.constant 0 : index
    %1 = vector.load %arg2[%c0_1, %c0_2] : memref<36x128xbf16, #tpu.memory_space<vmem>>, vector<36x128xbf16>
    %cst = arith.constant dense<0.000000e+00> : vector<8x128xf32>
    %2 = tpu.matmul %0, %1, %cst {dimension_numbers = #tpu.dot_dimension_numbers<[1], [0], [0], [1], [0, 0, 1, 1], [], []>} : vector<8x36xbf16>, vector<36x128xbf16>, vector<8x128xf32> -> vector<8x128xf32>
    %cst_3 = arith.constant dense<0.000000e+00> : vector<8xf32>
    %3 = vector.multi_reduction <add>, %2, %cst_3 [1] : vector<8x128xf32> to vector<8xf32>
    %4 = vector.shape_cast %3 : vector<8xf32> to vector<8x1xf32>
    %5 = arith.mulf %2, %2 : vector<8x128xf32>
    %cst_4 = arith.constant dense<0.000000e+00> : vector<8xf32>
    %6 = vector.multi_reduction <add>, %5, %cst_4 [1] : vector<8x128xf32> to vector<8xf32>
    %7 = vector.shape_cast %6 : vector<8xf32> to vector<8x1xf32>
    %cst_5 = arith.constant 7.812500e-03 : f32
    %8 = vector.broadcast %cst_5 : f32 to vector<8x1xf32>
    %9 = arith.mulf %4, %8 : vector<8x1xf32>
    %cst_6 = arith.constant 7.812500e-03 : f32
    %10 = vector.broadcast %cst_6 : f32 to vector<8x1xf32>
    %11 = arith.mulf %7, %10 : vector<8x1xf32>
    %12 = arith.mulf %9, %9 : vector<8x1xf32>
    %13 = arith.subf %11, %12 : vector<8x1xf32>
    %cst_7 = arith.constant 0.000000e+00 : f32
    %14 = vector.broadcast %cst_7 : f32 to vector<8x1xf32>
    %15 = arith.maximumf %13, %14 : vector<8x1xf32>
    %cst_8 = arith.constant 9.99999974E-6 : f32
    %16 = vector.broadcast %cst_8 : f32 to vector<8x1xf32>
    %17 = arith.addf %15, %16 : vector<8x1xf32>
    %18 = math.rsqrt %17 : vector<8x1xf32>
    %c0_9 = arith.constant 0 : index
    %c0_10 = arith.constant 0 : index
    %19 = vector.load %arg1[%c0_9, %c0_10] : memref<8x2xf32, #tpu.memory_space<vmem>>, vector<8x1xf32>
    %c0_11 = arith.constant 0 : index
    %c1 = arith.constant 1 : index
    %20 = vector.load %arg1[%c0_11, %c1] : memref<8x2xf32, #tpu.memory_space<vmem>>, vector<8x1xf32>
    %21 = arith.mulf %18, %19 : vector<8x1xf32>
    %22 = arith.mulf %9, %21 : vector<8x1xf32>
    %23 = arith.subf %20, %22 : vector<8x1xf32>
    %24 = vector.broadcast %21 : vector<8x1xf32> to vector<8x128xf32>
    %25 = arith.mulf %2, %24 : vector<8x128xf32>
    %26 = vector.broadcast %23 : vector<8x1xf32> to vector<8x128xf32>
    %27 = arith.addf %25, %26 : vector<8x128xf32>
    %cst_12 = arith.constant 0.000000e+00 : f32
    %28 = vector.broadcast %cst_12 : f32 to vector<8x128xf32>
    %29 = arith.maximumf %27, %28 : vector<8x128xf32>
    %c0_13 = arith.constant 0 : index
    %c0_14 = arith.constant 0 : index
    %30 = vector.load %arg3[%c0_13, %c0_14] : memref<8x128xf32, #tpu.memory_space<vmem>>, vector<8x128xf32>
    tpu.vector_store %arg3[%c0_13, %c0_14], %29 {strides = array<i32>} : memref<8x128xf32, #tpu.memory_space<vmem>>, vector<8x128xf32>,
    return
  }
}

</mosaic_0001>

<llo_original>
// kernel: panstem1_forward.1
$region0: #{panstem1_forward.1}
  #allocation0 [shape = 'u32[]', space=smem, size = 0x4, offset = 0x4, fixed_abs, tag = 'smem constant byte address 0x4 - core index']
  #allocation1 [shape = 'u32[144,128]{1,0:T(1,128)}', space=vmem, size = 0x12000, scoped, tag = 'internal scratch']
  %s0 = inlined_call_operand.vmem [shape: bf16[8,36], index: 0, kind: input, shape index: {}]
  %s1 = inlined_call_operand.vmem [shape: f32[8,2], index: 1, kind: input, shape index: {}]
  %s2 = inlined_call_operand.vmem [shape: bf16[36,128], index: 2, kind: input, shape index: {}]
  %s3 = inlined_call_operand.vmem [shape: f32[8,128], index: 3, kind: output, shape index: {}]
  %s4 = sld [smem:[#allocation0]]
  $region22: #{panstem1_forward.1} parent=0
    _
  %s6 = ssub.s32 1, %s4
  %s7 = scalar_select 0, %s6, %s4
  // Predicated region
  $region2: #{panstem1_forward.1} parent=0 // pred_check
    _
  $region3: #{panstem1_forward.1} parent=0 // pred_check_branch
    %9 = sbr.rel (0) target = $region5
  $region4: #{panstem1_forward.1} parent=0 // pred_region
    _
  $region5: #{panstem1_forward.1} parent=0 // pred_fallthru
    _
  // Predicated region
  $region6: #{panstem1_forward.1} parent=0 // pred_check
    _
  $region7: #{panstem1_forward.1} parent=0 // pred_check_branch
    %11 = sbr.rel (0) target = $region9
  $region8: #{panstem1_forward.1} parent=0 // pred_region
    _
  $region9: #{panstem1_forward.1} parent=0 // pred_fallthru
    _
  // Predicated region
  $region10: #{panstem1_forward.1} parent=0 // pred_check
    _
  $region11: #{panstem1_forward.1} parent=0 // pred_check_branch
    %13 = sbr.rel (0) target = $region13
  $region12: #{panstem1_forward.1} parent=0 // pred_region
    _
  $region13: #{panstem1_forward.1} parent=0 // pred_fallthru
    _
  %v15 = vld [vmem:[%s0] sm:$0xf]
  %v16 = vld [vmem:[%s2] sm:$0xf]
  %v17 = vld [vmem:[%s2 + $0x4] sm:$0xf]
  %v18 = vld [vmem:[%s2 + $0x8] sm:$0xf]
  %v19 = vld [vmem:[%s2 + $0xc] sm:$0xf]
  %v20 = vld [vmem:[%s2 + $0x10] sm:$0x3]
  %v26 = vunpack.c.l.b16 %v16
  %v27 = vunpack.c.l.b16 %v17
  %v28 = vunpack.c.l.b16 %v18
  %v29 = vunpack.c.l.b16 %v19
  %v30 = vunpack.c.l.b16 %v20
  %v31 = vpack.c.b16 %v27, %v26
  %v32 = vpack.c.b16 %v29, %v28
  %v33 = vpack.c.b16 %v30, %v30
  %vm36 = vcmask 293888
  %v38 = vsel %vm36, %v15, 0
  %vm40 = vcmask 1041408
  %v42 = vsel %vm40, %v33, 0
  %44 = vmatprep.subr.bf16.mxu0 0
  %45 = vmatpush1.bf16.msra.mxu0 %v31
  %46 = vmatprep.subr.bf16.mxu0 0
  %47 = vmatpush1.bf16.msra.mxu0 %v32
  %48 = vmatprep.subr.bf16.mxu0 0
  %49 = vmatpush1.bf16.msra.mxu0 %v42
  %50 = vmatprep.subr.bf16.mxu0 0
  %51 = vmatpush1.bf16.msra.mxu0 0
  %52 = vmatprep.subr.bf16.mxu0 0
  %53 = vmatpush1.bf16.msra.mxu0 0
  %54 = vmatprep.subr.bf16.mxu0 0
  %55 = vmatpush1.bf16.msra.mxu0 0
  %56 = vmatprep.subr.bf16.mxu0 0
  %57 = vmatpush1.bf16.msra.mxu0 0
  %58 = vmatprep.subr.bf16.mxu0 0
  %59 = vmatpush1.bf16.msra.mxu0 0
  %60 = vmatprep.subr.bf16.mxu0 0
  %61 = vmatpush1.bf16.msra.mxu0 0
  %62 = vmatprep.subr.bf16.mxu0 0
  %63 = vmatpush1.bf16.msra.mxu0 0
  %64 = vmatprep.subr.bf16.mxu0 0
  %65 = vmatpush1.bf16.msra.mxu0 0
  %66 = vmatprep.subr.bf16.mxu0 0
  %67 = vmatpush1.bf16.msra.mxu0 0
  %68 = vmatprep.subr.bf16.mxu0 0
  %69 = vmatpush1.bf16.msra.mxu0 0
  %70 = vmatprep.subr.bf16.mxu0 0
  %71 = vmatpush1.bf16.msra.mxu0 0
  %72 = vmatprep.subr.bf16.mxu0 0
  %73 = vmatpush1.bf16.msra.mxu0 0
  %74 = vmatprep.subr.bf16.mxu0 0
  %75 = vmatpush1.bf16.msra.mxu0 0
  %76 = vmatprep.mubr.bf16.mxu0 0
  %77 = vmatmul.mubr.bf16.gmra.mrb[0].mxu0 %v38
  %v78 = vpop.f32.mrb[0].mxu0
  %v79 = vadd.f32 0.0, %v78
  %v80 = vpop.f32.mrb[0].mxu0
  %v81 = vpop.f32.mrb[0].mxu0
  %v82 = vpop.f32.mrb[0].mxu0
  %83 = vdwg.mxu0
  %84 = vadd.xlane.f32.xlu0 %v79
  %v85 = vpop.xlane.xlu0 %84
  %v86 = vmul.f32 %v79, %v79
  %87 = vadd.xlane.f32.xlu0 %v86
  %v88 = vpop.xlane.xlu0 %87
  %v89 = vmul.f32 %v85, 0.0078125
  %v90 = vmul.f32 %v88, 0.0078125
  %v91 = vmul.f32 %v89, %v89
  %v92 = vsub.f32 %v90, %v91
  %v93 = vmax.f32 %v92, 0.0
  %v94 = vadd.f32 %v93, 1e-05
  %v95 = vrsqrt.pop %v94
  %v96 = vld [vmem:[%s1] sm:$0xff]
  %v97 = vmul.f32 %v95, %v96
  %v98 = vmul.f32 %v89, %v97
  %100 = vrot.lane.b32.xlu0 %v98, 1
  %v101 = vpop.permute.xlu0 %100
  %v103 = vsub.f32 %v96, %v101
  %105 = vset.pattern.permute.xlu0 0
  %106 = vperm.xlu0 %105, %v97
  %v107 = vpop.permute.xlu0 %106
  %v109 = vmul.f32 %v79, %v107
  %111 = vset.pattern.permute.xlu0 1
  %112 = vperm.xlu0 %111, %v103
  %v113 = vpop.permute.xlu0 %112
  %v115 = vadd.f32 %v109, %v113
  %v116 = vmax.f32 %v115, 0.0
  %117 = vst [vmem:[%s3] sm:$0xff] %v116
  // Predicated region
  $region14: #{panstem1_forward.1} parent=0 // pred_check
    _
  $region15: #{panstem1_forward.1} parent=0 // pred_check_branch
    %119 = sbr.rel (0) target = $region17
  $region16: #{panstem1_forward.1} parent=0 // pred_region
    _
  $region17: #{panstem1_forward.1} parent=0 // pred_fallthru
    _
  // Predicated region
  $region18: #{panstem1_forward.1} parent=0 // pred_check
    _
  $region19: #{panstem1_forward.1} parent=0 // pred_check_branch
    %121 = sbr.rel (0) target = $region21
  $region20: #{panstem1_forward.1} parent=0 // pred_region
    _
  $region21: #{panstem1_forward.1} parent=0 // pred_fallthru
    _

</llo_original>
